<compile_context>
chip_gen: v7x
topology: tpu7x:2x2x1
jax: 0.10.0
libtpu: 0.0.40
codegen_flags: <defaults>
</compile_context>

<pallas_src>
import functools
import math

import jax
import jax.numpy as jnp
from jax import lax
from jax.experimental import pallas as pl
from jax.experimental.pallas import tpu as pltpu

_NEG_BIG = -1e30          # additive mask bias (finite; no inf/NaN in-kernel)
_VALID_THRESH = -1e29     # rows whose running max never exceeded this had no edges
_VMEM_LIMIT = 32 * 1024 * 1024


def _round_up(x, m):
    return ((x + m - 1) // m) * m


def _pad_rows(x, n_pad):
    pad = n_pad - x.shape[0]
    if pad == 0:
        return x
    return jnp.pad(x, ((0, pad),) + ((0, 0),) * (x.ndim - 1))


def _pick_tiles(n_pad):
    # Prefer large tiles; keep >= 2 query tiles when possible (v7x megacore).
    tq_cands = [t for t in (512, 256, 128) if n_pad % t == 0]
    tq = next((t for t in tq_cands if n_pad // t >= 2), tq_cands[-1])
    tk = next(t for t in (1024, 512, 256, 128) if n_pad % t == 0)
    return tq, tk


# --------------------------------------------------------------------------
# Kernel 1: CentralityAwareEncoder (row-tiled)
#   out = self_feats @ Wfc^T + bfc + [betweenness, closeness] @ Wce^T + bce
# --------------------------------------------------------------------------
def encoder_kernel(sf_ref, bet_ref, clo_ref, wfc_ref, bfc_ref, wce_ref, bce_ref,
                   o_ref):
    sf = sf_ref[...].astype(jnp.bfloat16)                        # (tq, F)
    feat = jnp.dot(sf, wfc_ref[...],
                   preferred_element_type=jnp.float32) + bfc_ref[...]
    wce = wce_ref[...]                                           # (2, D) f32
    cenc = (bet_ref[...] * wce[0:1, :]
            + clo_ref[...] * wce[1:2, :]
            + bce_ref[...])
    o_ref[...] = (feat + cenc).astype(o_ref.dtype)               # bf16 out


def encoder_forward(self_feats, bet, clo, w_fc_t, b_fc, w_ce_t, b_ce):
    n_pad, F = self_feats.shape
    D = w_fc_t.shape[1]
    tq = 512 if n_pad % 512 == 0 else (256 if n_pad % 256 == 0 else 128)
    return pl.pallas_call(
        encoder_kernel,
        out_shape=jax.ShapeDtypeStruct((n_pad, D), jnp.bfloat16),
        grid=(n_pad // tq,),
        in_specs=[
            pl.BlockSpec((tq, F), lambda i: (i, 0)),
            pl.BlockSpec((tq, 1), lambda i: (i, 0)),
            pl.BlockSpec((tq, 1), lambda i: (i, 0)),
            pl.BlockSpec((F, D), lambda i: (0, 0)),
            pl.BlockSpec((1, D), lambda i: (0, 0)),
            pl.BlockSpec((2, D), lambda i: (0, 0)),
            pl.BlockSpec((1, D), lambda i: (0, 0)),
        ],
        out_specs=pl.BlockSpec((tq, D), lambda i: (i, 0)),
        compiler_params=pltpu.CompilerParams(
            dimension_semantics=("parallel",),
            vmem_limit_bytes=_VMEM_LIMIT),
    )(self_feats, bet, clo, w_fc_t, b_fc, w_ce_t, b_ce)


# --------------------------------------------------------------------------
# Kernel 2: one fused SignedDirectedAttention layer
#   (all relations + all heads + attn_weight_proj + residual + LayerNorm)
#   grid = (q row tiles, key tiles); online softmax over the key axis.
# --------------------------------------------------------------------------
def sda_layer_kernel(flags_ref,                      # scalar-prefetch (SMEM)
                     xq_ref, xk_ref, adj_ref, sign_ref,
                     wq_ref, bq_ref, wk_ref, bk_ref, wv_ref, bv_ref,
                     wp_ref, bp_ref, lnw_ref, lnb_ref,
                     o_ref,
                     q_sc, m_sc, l_sc, acc_sc,
                     *, num_rel, num_heads, head_dim):
    C = num_rel * num_heads
    d = head_dim
    qi = pl.program_id(0)
    ki = pl.program_id(1)
    n_kt = pl.num_programs(1)

    @pl.when(ki == 0)
    def _init():
        # One (tq, D) @ (D, C*d) matmul for all channels' queries.
        # sign_weight[h,r]/sqrt(d) is folded into wq/bq on the host;
        # node_sign_influence is folded here (per row).
        xq = xq_ref[...]                                         # (tq, D) bf16
        q_all = (jnp.dot(xq, wq_ref[...],
                         preferred_element_type=jnp.float32)
                 + bq_ref[...]) * sign_ref[...]                  # (tq, C*d) f32
        for c in range(C):
            q_sc[c] = q_all[:, c * d:(c + 1) * d].astype(jnp.bfloat16)
        m_sc[...] = jnp.full(m_sc.shape, _NEG_BIG, jnp.float32)
        l_sc[...] = jnp.zeros(l_sc.shape, jnp.float32)
        acc_sc[...] = jnp.zeros(acc_sc.shape, jnp.float32)

    # Block-sparsity skip: only run the heavy path when this (qi, ki) tile
    # contains at least one edge in any relation.  Skipping is exact: an empty
    # tile contributes nothing to the online softmax state.
    @pl.when(flags_ref[qi * n_kt + ki] != 0)
    def _compute():
        xk = xk_ref[...]                                         # (tk, D) bf16
        # One big matmul each for all channels' K and V (N = C*d = 256).
        k_all = (jnp.dot(xk, wk_ref[...], preferred_element_type=jnp.float32)
                 + bk_ref[...]).astype(jnp.bfloat16)             # (tk, C*d)
        v_all = (jnp.dot(xk, wv_ref[...], preferred_element_type=jnp.float32)
                 + bv_ref[...]).astype(jnp.bfloat16)             # (tk, C*d)
        for r in range(num_rel):
            # One additive mask bias per relation, shared by all heads.
            bias_r = jnp.where(adj_ref[r] > 0, 0.0, _NEG_BIG)    # (tq, tk) f32
            for h in range(num_heads):
                c = r * num_heads + h
                kc = k_all[:, c * d:(c + 1) * d]                 # (tk, d) bf16
                vc = v_all[:, c * d:(c + 1) * d]                 # (tk, d) bf16
                # scores = Q . K^T (contract last dims; no in-kernel transpose)
                s = lax.dot_general(
                    q_sc[c], kc,
                    dimension_numbers=(((1,), (1,)), ((), ())),
                    preferred_element_type=jnp.float32) + bias_r  # (tq, tk)
                m_prev = m_sc[c]                                  # (tq, 1)
                m_new = jnp.maximum(m_prev,
                                    jnp.max(s, axis=-1, keepdims=True))
                alpha = jnp.exp(m_prev - m_new)
                p = jnp.exp(s - m_new)        # masked entries underflow to 0
                l_sc[c] = alpha * l_sc[c] + jnp.sum(p, axis=-1, keepdims=True)
                acc_sc[c] = alpha * acc_sc[c] + jnp.dot(
                    p.astype(jnp.bfloat16), vc,
                    preferred_element_type=jnp.float32)
                m_sc[c] = m_new

    @pl.when(ki == n_kt - 1)
    def _finalize():
        # Normalize each channel, lane-concatenate to (tq, C*d) and project
        # with a single K=256 matmul (instead of C small matmuls + adds).
        outs = []
        for c in range(C):
            valid = m_sc[c] > _VALID_THRESH          # rows with >= 1 real edge
            inv_l = jnp.where(
                valid, pl.reciprocal(l_sc[c] + 1e-10, approx=True), 0.0)
            outs.append(acc_sc[c] * inv_l)           # (tq, d) f32; 0 if no edge
        o_cat = jnp.concatenate(outs, axis=-1).astype(jnp.bfloat16)  # (tq, C*d)
        proj = jnp.dot(o_cat, wp_ref[...],
                       preferred_element_type=jnp.float32)           # (tq, D)
        y = xq_ref[...].astype(jnp.float32) + proj + bp_ref[...]     # residual
        mean = jnp.mean(y, axis=-1, keepdims=True)
        var = jnp.mean(jnp.square(y - mean), axis=-1, keepdims=True)
        normed = (y - mean) * lax.rsqrt(var + 1e-5)
        o_ref[...] = (normed * lnw_ref[...] + lnb_ref[...]).astype(o_ref.dtype)


def sda_layer_forward(x, adj_i8, sign, tile_flags, prep, *,
                      num_rel, num_heads, head_dim, tq, tk):
    n_pad, D = x.shape
    C = num_rel * num_heads
    d = head_dim
    grid = (n_pad // tq, n_pad // tk)

    kernel = functools.partial(sda_layer_kernel, num_rel=num_rel,
                               num_heads=num_heads, head_dim=head_dim)
    qmap = lambda qi, ki, flags: (qi, 0)
    kmap = lambda qi, ki, flags: (ki, 0)
    wmap = lambda qi, ki, flags: (0, 0)
    in_specs = [
        pl.BlockSpec((tq, D), qmap),                                   # x (queries)
        pl.BlockSpec((tk, D), kmap),                                   # x (keys)
        pl.BlockSpec((num_rel, tq, tk), lambda qi, ki, flags: (0, qi, ki)),  # adj
        pl.BlockSpec((tq, 1), qmap),                                   # sign
        pl.BlockSpec((D, C * d), wmap),                                # wq slab
        pl.BlockSpec((1, C * d), wmap),                                # bq
        pl.BlockSpec((D, C * d), wmap),                                # wk slab
        pl.BlockSpec((1, C * d), wmap),                                # bk
        pl.BlockSpec((D, C * d), wmap),                                # wv slab
        pl.BlockSpec((1, C * d), wmap),                                # bv
        pl.BlockSpec((C * d, D), wmap),                                # w_proj slab
        pl.BlockSpec((1, D), wmap),                                    # b_proj
        pl.BlockSpec((1, D), wmap),                                    # ln_w
        pl.BlockSpec((1, D), wmap),                                    # ln_b
    ]
    scratch = [
        pltpu.VMEM((C, tq, d), jnp.bfloat16),   # cached Q (sign/scale folded)
        pltpu.VMEM((C, tq, 1), jnp.float32),    # running max
        pltpu.VMEM((C, tq, 1), jnp.float32),    # running denom
        pltpu.VMEM((C, tq, d), jnp.float32),    # running weighted V
    ]
    return pl.pallas_call(
        kernel,
        out_shape=jax.ShapeDtypeStruct((n_pad, D), jnp.bfloat16),
        grid_spec=pltpu.PrefetchScalarGridSpec(
            num_scalar_prefetch=1, grid=grid,
            in_specs=in_specs,
            out_specs=pl.BlockSpec((tq, D), qmap),
            scratch_shapes=scratch),
        compiler_params=pltpu.CompilerParams(
            dimension_semantics=("parallel", "arbitrary"),
            vmem_limit_bytes=_VMEM_LIMIT),
    )(tile_flags, x, x, adj_i8, sign,
      prep['wq'], prep['bq'], prep['wk'], prep['bk'], prep['wv'], prep['bv'],
      prep['wp'], prep['bp'], prep['ln_w'], prep['ln_b'])


# --------------------------------------------------------------------------
# Kernel 3: plain row-tiled linear (edge-logit head)
# --------------------------------------------------------------------------
def linear_kernel(x_ref, w_ref, b_ref, o_ref):
    o_ref[...] = jnp.dot(x_ref[...].astype(jnp.float32), w_ref[...],
                         preferred_element_type=jnp.float32) + b_ref[...]


def linear_forward(x, w_t, b):
    e_pad, fi = x.shape
    fo = w_t.shape[1]
    te = 128 if e_pad % 128 == 0 else e_pad
    return pl.pallas_call(
        linear_kernel,
        out_shape=jax.ShapeDtypeStruct((e_pad, fo), jnp.float32),
        grid=(e_pad // te,),
        in_specs=[pl.BlockSpec((te, fi), lambda i: (i, 0)),
                  pl.BlockSpec((fi, fo), lambda i: (0, 0)),
                  pl.BlockSpec((1, fo), lambda i: (0, 0))],
        out_specs=pl.BlockSpec((te, fo), lambda i: (i, 0)),
        compiler_params=pltpu.CompilerParams(
            dimension_semantics=("parallel",),
            vmem_limit_bytes=_VMEM_LIMIT),
    )(x, w_t, b)


# --------------------------------------------------------------------------
# Parameters (PyTorch-style shapes) + one-time kernel-layout packing
# --------------------------------------------------------------------------
def init_params(key, node_feat_dim, embed_dim, num_heads, num_layers,
                num_relations=4):
    keys = list(jax.random.split(key, 4 + num_layers * (3 * num_relations + 2)))
    it = iter(keys)

    def kaiming(k, shape):
        return jax.random.normal(k, shape, jnp.float32) * math.sqrt(2.0 / shape[1])

    def uniform_linear(k, out_f, in_f):
        bound = 1.0 / math.sqrt(in_f)
        kw, kb = jax.random.split(k)
        w = jax.random.uniform(kw, (out_f, in_f), jnp.float32, -bound, bound)
        b = jax.random.uniform(kb, (out_f,), jnp.float32, -bound, bound)
        return w, b

    HD = embed_dim * num_heads
    params = {
        'enc_w_fc': kaiming(next(it), (embed_dim, node_feat_dim)),
        'enc_b_fc': jnp.full((embed_dim,), 0.01, jnp.float32),
        'enc_w_ce': kaiming(next(it), (embed_dim, 2)),
        'enc_b_ce': jnp.full((embed_dim,), 0.01, jnp.float32),
        'layers': [],
    }
    params['link_w'], params['link_b'] = uniform_linear(next(it), 1, 2 * embed_dim)
    k_sw_all = next(it)

    for l in range(num_layers):
        wq, bq, wk, bk, wv, bv = [], [], [], [], [], []
        for _ in range(num_relations):
            w, b = uniform_linear(next(it), HD, embed_dim); wq.append(w); bq.append(b)
            w, b = uniform_linear(next(it), HD, embed_dim); wk.append(w); bk.append(b)
            w, b = uniform_linear(next(it), HD, embed_dim); wv.append(w); bv.append(b)
        w_proj, b_proj = uniform_linear(next(it), embed_dim, HD * num_relations)
        bound_sw = math.sqrt(6.0 / (num_heads + num_relations))
        sign_weight = jax.random.uniform(
            jax.random.fold_in(k_sw_all, l), (num_heads, num_relations),
            jnp.float32, -bound_sw, bound_sw)
        params['layers'].append({
            'wq': jnp.stack(wq), 'bq': jnp.stack(bq),
            'wk': jnp.stack(wk), 'bk': jnp.stack(bk),
            'wv': jnp.stack(wv), 'bv': jnp.stack(bv),
            'w_proj': w_proj, 'b_proj': b_proj,
            'sign_weight': sign_weight,
            'ln_w': jnp.ones((embed_dim,), jnp.float32),
            'ln_b': jnp.zeros((embed_dim,), jnp.float32),
        })
    return params


def _pack_layer(lp, *, embed_dim, num_heads, num_rel):
    """Pack per-relation PyTorch weights into channel-batched MXU slabs."""
    d = embed_dim
    C = num_rel * num_heads
    D = embed_dim

    def to_slab(w_stack):
        # (R, H*d, D) PyTorch (out,in) -> (D, C*d) with columns ordered c=r*H+h
        return jnp.transpose(w_stack, (2, 0, 1)).reshape(D, C * d)

    # fold sign_weight[h, r] / sqrt(d) into the Q projection (channel c = r*H+h)
    scale_c = (lp['sign_weight'].T / math.sqrt(embed_dim)).reshape(C)
    scale_cols = jnp.repeat(scale_c, d)                           # (C*d,)

    wq = to_slab(lp['wq']) * scale_cols[None, :]
    bq = lp['bq'].reshape(1, C * d) * scale_cols[None, :]
    wk = to_slab(lp['wk']); bk = lp['bk'].reshape(1, C * d)
    wv = to_slab(lp['wv']); bv = lp['bv'].reshape(1, C * d)
    wp = lp['w_proj'].T                                           # (C*d, D)
    return {
        'wq': wq.astype(jnp.bfloat16), 'bq': bq.astype(jnp.float32),
        'wk': wk.astype(jnp.bfloat16), 'bk': bk.astype(jnp.float32),
        'wv': wv.astype(jnp.bfloat16), 'bv': bv.astype(jnp.float32),
        'wp': wp.astype(jnp.bfloat16),
        'bp': lp['b_proj'].reshape(1, D),
        'ln_w': lp['ln_w'].reshape(1, D),
        'ln_b': lp['ln_b'].reshape(1, D),
    }


def pack_params(params, *, embed_dim, num_heads, num_relations):
    """One-time host-side packing (hoisted out of the forward path)."""
    return {
        'enc_wfc_t': params['enc_w_fc'].T.astype(jnp.bfloat16),
        'enc_bfc': params['enc_b_fc'].reshape(1, embed_dim),
        'enc_wce_t': params['enc_w_ce'].T,
        'enc_bce': params['enc_b_ce'].reshape(1, embed_dim),
        'link_w_t': params['link_w'].T,                           # (2D, 1)
        'link_b': params['link_b'].reshape(1, 1),
        'layers': [_pack_layer(lp, embed_dim=embed_dim, num_heads=num_heads,
                               num_rel=num_relations)
                   for lp in params['layers']],
    }


# --------------------------------------------------------------------------
# Full forward (== CA_SDGNN.forward)
# --------------------------------------------------------------------------
def ca_sdgnn_forward(packed, nodes, node_features, betweenness, closeness,
                     adj_matrices, node_sign_influence, *,
                     embed_dim, num_heads, num_layers, num_relations,
                     edge_list=None):
    N = int(nodes.shape[0])
    n_pad = _round_up(max(N, 1), 128)

    # glue: gathers / padding (plain XLA)
    self_feats = _pad_rows(node_features[nodes], n_pad)
    bet = _pad_rows(betweenness[nodes].reshape(N, 1), n_pad)
    clo = _pad_rows(closeness[nodes].reshape(N, 1), n_pad)
    sign = _pad_rows(node_sign_influence.reshape(N, 1).astype(jnp.float32), n_pad)

    adj_i8 = (adj_matrices > 0).astype(jnp.int8)                  # mask only
    pad = n_pad - N
    if pad:
        adj_i8 = jnp.pad(adj_i8, ((0, 0), (0, pad), (0, pad)))

    x = encoder_forward(self_feats, bet, clo,
                        packed['enc_wfc_t'], packed['enc_bfc'],
                        packed['enc_wce_t'], packed['enc_bce'])   # bf16

    tq, tk = _pick_tiles(n_pad)
    n_qt, n_kt = n_pad // tq, n_pad // tk
    # Per-(qi, ki) tile "any edge in any relation" flags for sparsity skip.
    tile_flags = jnp.any(
        adj_i8.reshape(num_relations, n_qt, tq, n_kt, tk) != 0,
        axis=(0, 2, 4)).astype(jnp.int32).reshape(-1)

    for l in range(num_layers):
        x = sda_layer_forward(x, adj_i8, sign, tile_flags, packed['layers'][l],
                              num_rel=num_relations, num_heads=num_heads,
                              head_dim=embed_dim, tq=tq, tk=tk)
        # TODO(synk): dropout is eval-mode identity (no deterministic equivalent).

    x = x[:N]

    if edge_list is not None:
        src_emb = x[edge_list[:, 0]]
        tgt_emb = x[edge_list[:, 1]]
        edge_embs = jnp.concatenate([src_emb, tgt_emb],
                                    axis=1).astype(jnp.float32)   # (E, 2D)
        E = edge_embs.shape[0]
        e_pad = _round_up(E, 8)
        logits = linear_forward(_pad_rows(edge_embs, e_pad),
                                packed['link_w_t'], packed['link_b'])
        return jnp.squeeze(logits[:E])
    return x.astype(jnp.float32)


# --------------------------------------------------------------------------
if __name__ == "__main__":
    N, F, D, H, L, R = 8, 16, 32, 2, 2, 4
    key = jax.random.PRNGKey(0)
    k_param, k_feat, k_bet, k_clo, k_adj, k_sign = jax.random.split(key, 6)

    params = init_params(k_param, F, D, H, L, R)
    packed = pack_params(params, embed_dim=D, num_heads=H, num_relations=R)

    node_features = jax.random.normal(k_feat, (N, F), jnp.float32)
    betweenness = jax.random.uniform(k_bet, (N,), jnp.float32)
    closeness = jax.random.uniform(k_clo, (N,), jnp.float32)
    adj_matrices = (jax.random.uniform(k_adj, (R, N, N)) > 0.5).astype(jnp.float32)
    node_sign_influence = jax.random.uniform(k_sign, (N,), jnp.float32,
                                             minval=-1.0, maxval=1.0)
    nodes = jnp.arange(N)

    # node-embedding path (edge_list=None)
    node_embs = ca_sdgnn_forward(packed, nodes, node_features, betweenness,
                                 closeness, adj_matrices, node_sign_influence,
                                 embed_dim=D, num_heads=H, num_layers=L,
                                 num_relations=R)
    jax.block_until_ready(node_embs)
    assert node_embs.shape == (N, D)
    assert bool(jnp.all(jnp.isfinite(node_embs)))

    # link-logit path (edge_list given)
    edge_list = jnp.array([[0, 1], [2, 3], [4, 5]], dtype=jnp.int32)
    edge_logits = ca_sdgnn_forward(packed, nodes, node_features, betweenness,
                                   closeness, adj_matrices, node_sign_influence,
                                   embed_dim=D, num_heads=H, num_layers=L,
                                   num_relations=R, edge_list=edge_list)
    jax.block_until_ready(edge_logits)
    assert edge_logits.shape == (3,)
    assert bool(jnp.all(jnp.isfinite(edge_logits)))

    print("KERNEL_OK")
</pallas_src>

<mosaic_0001>
module attributes {stable_mosaic.version = 11 : i64} {
  func.func @encoder_kernel(%arg0: i32, %arg1: memref<128x16xf32, #tpu.memory_space<vmem>>, %arg2: memref<128x1xf32, #tpu.memory_space<vmem>>, %arg3: memref<128x1xf32, #tpu.memory_space<vmem>>, %arg4: memref<16x32xbf16, #tpu.memory_space<vmem>>, %arg5: memref<1x32xf32, #tpu.memory_space<vmem>>, %arg6: memref<2x32xf32, #tpu.memory_space<vmem>>, %arg7: memref<1x32xf32, #tpu.memory_space<vmem>>, %arg8: memref<128x32xbf16, #tpu.memory_space<vmem>>) attributes {dimension_semantics = [#tpu.dimension_semantics<parallel>], iteration_bounds = array<i64: 1>, scalar_prefetch = 0 : i64, scratch_operands = 0 : i64, tpu.core_type = #tpu.core_type<tc>, window_params = [{transform_indices = @transform_0, window_bounds = array<i64: 128, 16>}, {transform_indices = @transform_1, window_bounds = array<i64: 128, 1>}, {transform_indices = @transform_2, window_bounds = array<i64: 128, 1>}, {pipeline_mode = #tpu.pipeline_mode<synchronous>, transform_indices = @transform_3, window_bounds = array<i64: 16, 32>}, {pipeline_mode = #tpu.pipeline_mode<synchronous>, transform_indices = @transform_4, window_bounds = array<i64: 1, 32>}, {pipeline_mode = #tpu.pipeline_mode<synchronous>, transform_indices = @transform_5, window_bounds = array<i64: 2, 32>}, {pipeline_mode = #tpu.pipeline_mode<synchronous>, transform_indices = @transform_6, window_bounds = array<i64: 1, 32>}, {transform_indices = @transform_7, window_bounds = array<i64: 128, 32>}]} {
    %c0 = arith.constant 0 : index
    %c0_0 = arith.constant 0 : index
    %0 = vector.load %arg1[%c0, %c0_0] : memref<128x16xf32, #tpu.memory_space<vmem>>, vector<128x16xf32>
    %1 = arith.truncf %0 : vector<128x16xf32> to vector<128x16xbf16>
    %c0_1 = arith.constant 0 : index
    %c0_2 = arith.constant 0 : index
    %2 = vector.load %arg4[%c0_1, %c0_2] : memref<16x32xbf16, #tpu.memory_space<vmem>>, vector<16x32xbf16>
    %cst = arith.constant dense<0.000000e+00> : vector<128x32xf32>
    %3 = tpu.matmul %1, %2, %cst {dimension_numbers = #tpu.dot_dimension_numbers<[1], [0], [0], [1], [0, 0, 1, 1], [], []>} : vector<128x16xbf16>, vector<16x32xbf16>, vector<128x32xf32> -> vector<128x32xf32>
    %c0_3 = arith.constant 0 : index
    %c0_4 = arith.constant 0 : index
    %4 = vector.load %arg5[%c0_3, %c0_4] : memref<1x32xf32, #tpu.memory_space<vmem>>, vector<1x32xf32>
    %5 = vector.broadcast %4 : vector<1x32xf32> to vector<128x32xf32>
    %6 = arith.addf %3, %5 : vector<128x32xf32>
    %c0_5 = arith.constant 0 : index
    %c0_6 = arith.constant 0 : index
    %7 = vector.load %arg6[%c0_5, %c0_6] : memref<2x32xf32, #tpu.memory_space<vmem>>, vector<2x32xf32>
    %c0_7 = arith.constant 0 : index
    %c0_8 = arith.constant 0 : index
    %8 = vector.load %arg2[%c0_7, %c0_8] : memref<128x1xf32, #tpu.memory_space<vmem>>, vector<128x1xf32>
    %9 = vector.extract_strided_slice %7 {offsets = [0, 0], sizes = [1, 32], strides = [1, 1]} : vector<2x32xf32> to vector<1x32xf32>
    %10 = vector.broadcast %8 : vector<128x1xf32> to vector<128x32xf32>
    %11 = vector.broadcast %9 : vector<1x32xf32> to vector<128x32xf32>
    %12 = arith.mulf %10, %11 : vector<128x32xf32>
    %c0_9 = arith.constant 0 : index
    %c0_10 = arith.constant 0 : index
    %13 = vector.load %arg3[%c0_9, %c0_10] : memref<128x1xf32, #tpu.memory_space<vmem>>, vector<128x1xf32>
    %14 = vector.extract_strided_slice %7 {offsets = [1, 0], sizes = [1, 32], strides = [1, 1]} : vector<2x32xf32> to vector<1x32xf32>
    %15 = vector.broadcast %13 : vector<128x1xf32> to vector<128x32xf32>
    %16 = vector.broadcast %14 : vector<1x32xf32> to vector<128x32xf32>
    %17 = arith.mulf %15, %16 : vector<128x32xf32>
    %18 = arith.addf %12, %17 : vector<128x32xf32>
    %c0_11 = arith.constant 0 : index
    %c0_12 = arith.constant 0 : index
    %19 = vector.load %arg7[%c0_11, %c0_12] : memref<1x32xf32, #tpu.memory_space<vmem>>, vector<1x32xf32>
    %20 = vector.broadcast %19 : vector<1x32xf32> to vector<128x32xf32>
    %21 = arith.addf %18, %20 : vector<128x32xf32>
    %22 = arith.addf %6, %21 : vector<128x32xf32>
    %23 = arith.truncf %22 : vector<128x32xf32> to vector<128x32xbf16>
    %c0_13 = arith.constant 0 : index
    %c0_14 = arith.constant 0 : index
    %24 = vector.load %arg8[%c0_13, %c0_14] : memref<128x32xbf16, #tpu.memory_space<vmem>>, vector<128x32xbf16>
    tpu.vector_store %arg8[%c0_13, %c0_14], %23 {strides = array<i32>} : memref<128x32xbf16, #tpu.memory_space<vmem>>, vector<128x32xbf16>,
    return
  }
  func.func @transform_0(%arg0: i32) -> (i32, i32) {
    %c0_i32 = arith.constant 0 : i32
    %c0_i32_0 = arith.constant 0 : i32
    return %arg0, %c0_i32 : i32, i32
  }
  func.func @transform_1(%arg0: i32) -> (i32, i32) {
    %c0_i32 = arith.constant 0 : i32
    %c0_i32_0 = arith.constant 0 : i32
    return %arg0, %c0_i32 : i32, i32
  }
  func.func @transform_2(%arg0: i32) -> (i32, i32) {
    %c0_i32 = arith.constant 0 : i32
    %c0_i32_0 = arith.constant 0 : i32
    return %arg0, %c0_i32 : i32, i32
  }
  func.func @transform_3(%arg0: i32) -> (i32, i32) {
    %c0_i32 = arith.constant 0 : i32
    %c0_i32_0 = arith.constant 0 : i32
    %c0_i32_1 = arith.constant 0 : i32
    return %c0_i32, %c0_i32_0 : i32, i32
  }
  func.func @transform_4(%arg0: i32) -> (i32, i32) {
    %c0_i32 = arith.constant 0 : i32
    %c0_i32_0 = arith.constant 0 : i32
    %c0_i32_1 = arith.constant 0 : i32
    return %c0_i32, %c0_i32_0 : i32, i32
  }
  func.func @transform_5(%arg0: i32) -> (i32, i32) {
    %c0_i32 = arith.constant 0 : i32
    %c0_i32_0 = arith.constant 0 : i32
    %c0_i32_1 = arith.constant 0 : i32
    return %c0_i32, %c0_i32_0 : i32, i32
  }
  func.func @transform_6(%arg0: i32) -> (i32, i32) {
    %c0_i32 = arith.constant 0 : i32
    %c0_i32_0 = arith.constant 0 : i32
    %c0_i32_1 = arith.constant 0 : i32
    return %c0_i32, %c0_i32_0 : i32, i32
  }
  func.func @transform_7(%arg0: i32) -> (i32, i32) {
    %c0_i32 = arith.constant 0 : i32
    %c0_i32_0 = arith.constant 0 : i32
    return %arg0, %c0_i32 : i32, i32
  }
}

</mosaic_0001>

<llo_original>
// kernel: tpu_custom_call.1
$region0: #{tpu_custom_call.1}
  #allocation0 [shape = 'u32[]', space=smem, size = 0x4, offset = 0x4, fixed_abs, tag = 'smem constant byte address 0x4 - core index']
  #allocation1 [shape = 'u32[144,128]{1,0:T(1,128)}', space=vmem, size = 0x12000, scoped, tag = 'internal scratch']
  %s0 = inlined_call_operand.vmem [shape: f32[128,16], index: 0, kind: input, shape index: {}]
  %s1 = inlined_call_operand.vmem [shape: f32[128,1], index: 1, kind: input, shape index: {}]
  %s2 = inlined_call_operand.vmem [shape: f32[128,1], index: 2, kind: input, shape index: {}]
  %s3 = inlined_call_operand.vmem [shape: bf16[16,32], index: 3, kind: input, shape index: {}]
  %s4 = inlined_call_operand.vmem [shape: f32[1,32], index: 4, kind: input, shape index: {}]
  %s5 = inlined_call_operand.vmem [shape: f32[2,32], index: 5, kind: input, shape index: {}]
  %s6 = inlined_call_operand.vmem [shape: f32[1,32], index: 6, kind: input, shape index: {}]
  %s7 = inlined_call_operand.vmem [shape: bf16[128,32], index: 7, kind: output, shape index: {}]
  %s8 = sld [smem:[#allocation0]]
  $region38: #{tpu_custom_call.1} parent=0
    _
  %s10 = ssub.s32 1, %s8
  %s11 = scalar_select 0, %s10, %s8
  // Predicated region
  $region2: #{tpu_custom_call.1} parent=0 // pred_check
    _
  $region3: #{tpu_custom_call.1} parent=0 // pred_check_branch
    %13 = sbr.rel (0) target = $region5
  $region4: #{tpu_custom_call.1} parent=0 // pred_region
    _
  $region5: #{tpu_custom_call.1} parent=0 // pred_fallthru
    _
  // Predicated region
  $region6: #{tpu_custom_call.1} parent=0 // pred_check
    _
  $region7: #{tpu_custom_call.1} parent=0 // pred_check_branch
    %15 = sbr.rel (0) target = $region9
  $region8: #{tpu_custom_call.1} parent=0 // pred_region
    _
  $region9: #{tpu_custom_call.1} parent=0 // pred_fallthru
    _
  // Predicated region
  $region10: #{tpu_custom_call.1} parent=0 // pred_check
    _
  $region11: #{tpu_custom_call.1} parent=0 // pred_check_branch
    %17 = sbr.rel (0) target = $region13
  $region12: #{tpu_custom_call.1} parent=0 // pred_region
    _
  $region13: #{tpu_custom_call.1} parent=0 // pred_fallthru
    _
  // Predicated region
  $region14: #{tpu_custom_call.1} parent=0 // pred_check
    _
  $region15: #{tpu_custom_call.1} parent=0 // pred_check_branch
    %19 = sbr.rel (0) target = $region17
  $region16: #{tpu_custom_call.1} parent=0 // pred_region
    _
  $region17: #{tpu_custom_call.1} parent=0 // pred_fallthru
    _
  // Predicated region
  $region18: #{tpu_custom_call.1} parent=0 // pred_check
    _
  $region19: #{tpu_custom_call.1} parent=0 // pred_check_branch
    %21 = sbr.rel (0) target = $region21
  $region20: #{tpu_custom_call.1} parent=0 // pred_region
    _
  $region21: #{tpu_custom_call.1} parent=0 // pred_fallthru
    _
  // Predicated region
  $region22: #{tpu_custom_call.1} parent=0 // pred_check
    _
  $region23: #{tpu_custom_call.1} parent=0 // pred_check_branch
    %23 = sbr.rel (0) target = $region25
  $region24: #{tpu_custom_call.1} parent=0 // pred_region
    _
  $region25: #{tpu_custom_call.1} parent=0 // pred_fallthru
    _
  // Predicated region
  $region26: #{tpu_custom_call.1} parent=0 // pred_check
    _
  $region27: #{tpu_custom_call.1} parent=0 // pred_check_branch
    %25 = sbr.rel (0) target = $region29
  $region28: #{tpu_custom_call.1} parent=0 // pred_region
    _
  $region29: #{tpu_custom_call.1} parent=0 // pred_fallthru
    _
  %v27 = vld [vmem:[%s0] sm:$0xff]
  %v28 = vld [vmem:[%s0 + $0x8] sm:$0xff]
  %v29 = vld [vmem:[%s0 + $0x10] sm:$0xff]
  %v30 = vld [vmem:[%s0 + $0x18] sm:$0xff]
  %v31 = vld [vmem:[%s0 + $0x20] sm:$0xff]
  %v32 = vld [vmem:[%s0 + $0x28] sm:$0xff]
  %v33 = vld [vmem:[%s0 + $0x30] sm:$0xff]
  %v34 = vld [vmem:[%s0 + $0x38] sm:$0xff]
  %v35 = vld [vmem:[%s0 + $0x40] sm:$0xff]
  %v36 = vld [vmem:[%s0 + $0x48] sm:$0xff]
  %v37 = vld [vmem:[%s0 + $0x50] sm:$0xff]
  %v38 = vld [vmem:[%s0 + $0x58] sm:$0xff]
  %v39 = vld [vmem:[%s0 + $0x60] sm:$0xff]
  %v40 = vld [vmem:[%s0 + $0x68] sm:$0xff]
  %v41 = vld [vmem:[%s0 + $0x70] sm:$0xff]
  %v42 = vld [vmem:[%s0 + $0x78] sm:$0xff]
  %v43 = vpack.c.bf16 %v28, %v27
  %v44 = vpack.c.bf16 %v30, %v29
  %v45 = vpack.c.bf16 %v32, %v31
  %v46 = vpack.c.bf16 %v34, %v33
  %v47 = vpack.c.bf16 %v36, %v35
  %v48 = vpack.c.bf16 %v38, %v37
  %v49 = vpack.c.bf16 %v40, %v39
  %v50 = vpack.c.bf16 %v42, %v41
  %v51 = vld [vmem:[%s3] sm:$0xf]
  %v52 = vld [vmem:[%s3 + $0x4] sm:$0xf]
  %v53 = vld [vmem:[%s4] sm:$0x1]
  %v55 = vlaneseq
  %v56 = vshrl.u32 %v55, 7
  %v57 = vsub.s32 0, %v56
  %v58 = vrot.slane %v53, %v57
  %v62 = vunpack.c.l.b16 %v51
  %v63 = vunpack.c.l.b16 %v52
  %v64 = vpack.c.b16 %v63, %v62
  %vm66 = vcmask 130048
  %v68 = vsel %vm66, %v43, 0
  %v71 = vsel %vm66, %v44, 0
  %v74 = vsel %vm66, %v45, 0
  %v77 = vsel %vm66, %v46, 0
  %v80 = vsel %vm66, %v47, 0
  %v83 = vsel %vm66, %v48, 0
  %v86 = vsel %vm66, %v49, 0
  %v89 = vsel %vm66, %v50, 0
  %91 = vmatprep.subr.bf16.mxu0 0
  %92 = vmatpush1.bf16.msra.mxu0 %v64
  %93 = vmatprep.subr.bf16.mxu0 0
  %94 = vmatpush1.bf16.msra.mxu0 0
  %95 = vmatprep.subr.bf16.mxu0 0
  %96 = vmatpush1.bf16.msra.mxu0 0
  %97 = vmatprep.subr.bf16.mxu0 0
  %98 = vmatpush1.bf16.msra.mxu0 0
  %99 = vmatprep.subr.bf16.mxu0 0
  %100 = vmatpush1.bf16.msra.mxu0 0
  %101 = vmatprep.subr.bf16.mxu0 0
  %102 = vmatpush1.bf16.msra.mxu0 0
  %103 = vmatprep.subr.bf16.mxu0 0
  %104 = vmatpush1.bf16.msra.mxu0 0
  %105 = vmatprep.subr.bf16.mxu0 0
  %106 = vmatpush1.bf16.msra.mxu0 0
  %107 = vmatprep.subr.bf16.mxu0 0
  %108 = vmatpush1.bf16.msra.mxu0 0
  %109 = vmatprep.subr.bf16.mxu0 0
  %110 = vmatpush1.bf16.msra.mxu0 0
  %111 = vmatprep.subr.bf16.mxu0 0
  %112 = vmatpush1.bf16.msra.mxu0 0
  %113 = vmatprep.subr.bf16.mxu0 0
  %114 = vmatpush1.bf16.msra.mxu0 0
  %115 = vmatprep.subr.bf16.mxu0 0
  %116 = vmatpush1.bf16.msra.mxu0 0
  %117 = vmatprep.subr.bf16.mxu0 0
  %118 = vmatpush1.bf16.msra.mxu0 0
  %119 = vmatprep.subr.bf16.mxu0 0
  %120 = vmatpush1.bf16.msra.mxu0 0
  %121 = vmatprep.subr.bf16.mxu0 0
  %122 = vmatpush1.bf16.msra.mxu0 0
  %123 = vmatprep.mubr.bf16.mxu0 0
  %124 = vmatmul.mubr.bf16.gmra.mrb[0].mxu0 %v68
  %v125 = vpop.f32.mrb[0].mxu0
  %v126 = vadd.f32 %v58, %v125
  %v127 = vpop.f32.mrb[0].mxu0
  %v128 = vpop.f32.mrb[0].mxu0
  %v129 = vadd.f32 %v58, %v128
  %v130 = vpop.f32.mrb[0].mxu0
  %131 = vmatprep.mubr.bf16.mxu0 0
  %132 = vmatmul.mubr.bf16.gmra.mrb[0].mxu0 %v71
  %v133 = vpop.f32.mrb[0].mxu0
  %v134 = vadd.f32 %v58, %v133
  %v135 = vpop.f32.mrb[0].mxu0
  %v136 = vpop.f32.mrb[0].mxu0
  %v137 = vadd.f32 %v58, %v136
  %v138 = vpop.f32.mrb[0].mxu0
  %139 = vmatprep.mubr.bf16.mxu0 0
  %140 = vmatmul.mubr.bf16.gmra.mrb[0].mxu0 %v74
  %v141 = vpop.f32.mrb[0].mxu0
  %v142 = vadd.f32 %v58, %v141
  %v143 = vpop.f32.mrb[0].mxu0
  %v144 = vpop.f32.mrb[0].mxu0
  %v145 = vadd.f32 %v58, %v144
  %v146 = vpop.f32.mrb[0].mxu0
  %147 = vmatprep.mubr.bf16.mxu0 0
  %148 = vmatmul.mubr.bf16.gmra.mrb[0].mxu0 %v77
  %v149 = vpop.f32.mrb[0].mxu0
  %v150 = vadd.f32 %v58, %v149
  %v151 = vpop.f32.mrb[0].mxu0
  %v152 = vpop.f32.mrb[0].mxu0
  %v153 = vadd.f32 %v58, %v152
  %v154 = vpop.f32.mrb[0].mxu0
  %155 = vmatprep.mubr.bf16.mxu0 0
  %156 = vmatmul.mubr.bf16.gmra.mrb[0].mxu0 %v80
  %v157 = vpop.f32.mrb[0].mxu0
  %v158 = vadd.f32 %v58, %v157
  %v159 = vpop.f32.mrb[0].mxu0
  %v160 = vpop.f32.mrb[0].mxu0
  %v161 = vadd.f32 %v58, %v160
  %v162 = vpop.f32.mrb[0].mxu0
  %163 = vmatprep.mubr.bf16.mxu0 0
  %164 = vmatmul.mubr.bf16.gmra.mrb[0].mxu0 %v83
  %v165 = vpop.f32.mrb[0].mxu0
  %v166 = vadd.f32 %v58, %v165
  %v167 = vpop.f32.mrb[0].mxu0
  %v168 = vpop.f32.mrb[0].mxu0
  %v169 = vadd.f32 %v58, %v168
  %v170 = vpop.f32.mrb[0].mxu0
  %171 = vmatprep.mubr.bf16.mxu0 0
  %172 = vmatmul.mubr.bf16.gmra.mrb[0].mxu0 %v86
  %v173 = vpop.f32.mrb[0].mxu0
  %v174 = vadd.f32 %v58, %v173
  %v175 = vpop.f32.mrb[0].mxu0
  %v176 = vpop.f32.mrb[0].mxu0
  %v177 = vadd.f32 %v58, %v176
  %v178 = vpop.f32.mrb[0].mxu0
  %179 = vmatprep.mubr.bf16.mxu0 0
  %180 = vmatmul.mubr.bf16.gmra.mrb[0].mxu0 %v89
  %v181 = vpop.f32.mrb[0].mxu0
  %v182 = vadd.f32 %v58, %v181
  %v183 = vpop.f32.mrb[0].mxu0
  %v184 = vpop.f32.mrb[0].mxu0
  %v185 = vadd.f32 %v58, %v184
  %v186 = vpop.f32.mrb[0].mxu0
  %187 = vdwg.mxu0
  %v188 = vld [vmem:[%s5] sm:$0x3]
  %v189 = vld [vmem:[%s1] sm:$0xff]
  %v190 = vld [vmem:[%s1 + $0x8] sm:$0xff]
  %v191 = vld [vmem:[%s1 + $0x10] sm:$0xff]
  %v192 = vld [vmem:[%s1 + $0x18] sm:$0xff]
  %v193 = vld [vmem:[%s1 + $0x20] sm:$0xff]
  %v194 = vld [vmem:[%s1 + $0x28] sm:$0xff]
  %v195 = vld [vmem:[%s1 + $0x30] sm:$0xff]
  %v196 = vld [vmem:[%s1 + $0x38] sm:$0xff]
  %v197 = vld [vmem:[%s1 + $0x40] sm:$0xff]
  %v198 = vld [vmem:[%s1 + $0x48] sm:$0xff]
  %v199 = vld [vmem:[%s1 + $0x50] sm:$0xff]
  %v200 = vld [vmem:[%s1 + $0x58] sm:$0xff]
  %v201 = vld [vmem:[%s1 + $0x60] sm:$0xff]
  %v202 = vld [vmem:[%s1 + $0x68] sm:$0xff]
  %v203 = vld [vmem:[%s1 + $0x70] sm:$0xff]
  %v204 = vld [vmem:[%s1 + $0x78] sm:$0xff]
  %206 = vset.pattern.permute.xlu0 0
  %207 = vperm.xlu0 %206, %v189
  %v208 = vpop.permute.xlu0 %207
  %211 = vset.pattern.permute.xlu0 0
  %212 = vperm.xlu0 %211, %v190
  %v213 = vpop.permute.xlu0 %212
  %216 = vset.pattern.permute.xlu0 0
  %217 = vperm.xlu0 %216, %v191
  %v218 = vpop.permute.xlu0 %217
  %221 = vset.pattern.permute.xlu0 0
  %222 = vperm.xlu0 %221, %v192
  %v223 = vpop.permute.xlu0 %222
  %226 = vset.pattern.permute.xlu0 0
  %227 = vperm.xlu0 %226, %v193
  %v228 = vpop.permute.xlu0 %227
  %231 = vset.pattern.permute.xlu0 0
  %232 = vperm.xlu0 %231, %v194
  %v233 = vpop.permute.xlu0 %232
  %236 = vset.pattern.permute.xlu0 0
  %237 = vperm.xlu0 %236, %v195
  %v238 = vpop.permute.xlu0 %237
  %241 = vset.pattern.permute.xlu0 0
  %242 = vperm.xlu0 %241, %v196
  %v243 = vpop.permute.xlu0 %242
  %246 = vset.pattern.permute.xlu0 0
  %247 = vperm.xlu0 %246, %v197
  %v248 = vpop.permute.xlu0 %247
  %251 = vset.pattern.permute.xlu0 0
  %252 = vperm.xlu0 %251, %v198
  %v253 = vpop.permute.xlu0 %252
  %256 = vset.pattern.permute.xlu0 0
  %257 = vperm.xlu0 %256, %v199
  %v258 = vpop.permute.xlu0 %257
  %261 = vset.pattern.permute.xlu0 0
  %262 = vperm.xlu0 %261, %v200
  %v263 = vpop.permute.xlu0 %262
  %266 = vset.pattern.permute.xlu0 0
  %267 = vperm.xlu0 %266, %v201
  %v268 = vpop.permute.xlu0 %267
  %271 = vset.pattern.permute.xlu0 0
  %272 = vperm.xlu0 %271, %v202
  %v273 = vpop.permute.xlu0 %272
  %276 = vset.pattern.permute.xlu0 0
  %277 = vperm.xlu0 %276, %v203
  %v278 = vpop.permute.xlu0 %277
  %281 = vset.pattern.permute.xlu0 0
  %282 = vperm.xlu0 %281, %v204
  %v283 = vpop.permute.xlu0 %282
  %v285 = vlaneseq
  %v286 = vshrl.u32 %v285, 7
  %v287 = vsub.s32 0, %v286
  %v288 = vrot.slane %v188, %v287
  %v289 = vmul.f32 %v208, %v288
  %v290 = vmul.f32 %v213, %v288
  %v291 = vmul.f32 %v218, %v288
  %v292 = vmul.f32 %v223, %v288
  %v293 = vmul.f32 %v228, %v288
  %v294 = vmul.f32 %v233, %v288
  %v295 = vmul.f32 %v238, %v288
  %v296 = vmul.f32 %v243, %v288
  %v297 = vmul.f32 %v248, %v288
  %v298 = vmul.f32 %v253, %v288
  %v299 = vmul.f32 %v258, %v288
  %v300 = vmul.f32 %v263, %v288
  %v301 = vmul.f32 %v268, %v288
  %v302 = vmul.f32 %v273, %v288
  %v303 = vmul.f32 %v278, %v288
  %v304 = vmul.f32 %v283, %v288
  %v305 = vld [vmem:[%s2] sm:$0xff]
  %v306 = vld [vmem:[%s2 + $0x8] sm:$0xff]
  %v307 = vld [vmem:[%s2 + $0x10] sm:$0xff]
  %v308 = vld [vmem:[%s2 + $0x18] sm:$0xff]
  %v309 = vld [vmem:[%s2 + $0x20] sm:$0xff]
  %v310 = vld [vmem:[%s2 + $0x28] sm:$0xff]
  %v311 = vld [vmem:[%s2 + $0x30] sm:$0xff]
  %v312 = vld [vmem:[%s2 + $0x38] sm:$0xff]
  %v313 = vld [vmem:[%s2 + $0x40] sm:$0xff]
  %v314 = vld [vmem:[%s2 + $0x48] sm:$0xff]
  %v315 = vld [vmem:[%s2 + $0x50] sm:$0xff]
  %v316 = vld [vmem:[%s2 + $0x58] sm:$0xff]
  %v317 = vld [vmem:[%s2 + $0x60] sm:$0xff]
  %v318 = vld [vmem:[%s2 + $0x68] sm:$0xff]
  %v319 = vld [vmem:[%s2 + $0x70] sm:$0xff]
  %v320 = vld [vmem:[%s2 + $0x78] sm:$0xff]
  %322 = vset.pattern.permute.xlu0 0
  %323 = vperm.xlu0 %322, %v305
  %v324 = vpop.permute.xlu0 %323
  %327 = vset.pattern.permute.xlu0 0
  %328 = vperm.xlu0 %327, %v306
  %v329 = vpop.permute.xlu0 %328
  %332 = vset.pattern.permute.xlu0 0
  %333 = vperm.xlu0 %332, %v307
  %v334 = vpop.permute.xlu0 %333
  %337 = vset.pattern.permute.xlu0 0
  %338 = vperm.xlu0 %337, %v308
  %v339 = vpop.permute.xlu0 %338
  %342 = vset.pattern.permute.xlu0 0
  %343 = vperm.xlu0 %342, %v309
  %v344 = vpop.permute.xlu0 %343
  %347 = vset.pattern.permute.xlu0 0
  %348 = vperm.xlu0 %347, %v310
  %v349 = vpop.permute.xlu0 %348
  %352 = vset.pattern.permute.xlu0 0
  %353 = vperm.xlu0 %352, %v311
  %v354 = vpop.permute.xlu0 %353
  %357 = vset.pattern.permute.xlu0 0
  %358 = vperm.xlu0 %357, %v312
  %v359 = vpop.permute.xlu0 %358
  %362 = vset.pattern.permute.xlu0 0
  %363 = vperm.xlu0 %362, %v313
  %v364 = vpop.permute.xlu0 %363
  %367 = vset.pattern.permute.xlu0 0
  %368 = vperm.xlu0 %367, %v314
  %v369 = vpop.permute.xlu0 %368
  %372 = vset.pattern.permute.xlu0 0
  %373 = vperm.xlu0 %372, %v315
  %v374 = vpop.permute.xlu0 %373
  %377 = vset.pattern.permute.xlu0 0
  %378 = vperm.xlu0 %377, %v316
  %v379 = vpop.permute.xlu0 %378
  %382 = vset.pattern.permute.xlu0 0
  %383 = vperm.xlu0 %382, %v317
  %v384 = vpop.permute.xlu0 %383
  %387 = vset.pattern.permute.xlu0 0
  %388 = vperm.xlu0 %387, %v318
  %v389 = vpop.permute.xlu0 %388
  %392 = vset.pattern.permute.xlu0 0
  %393 = vperm.xlu0 %392, %v319
  %v394 = vpop.permute.xlu0 %393
  %397 = vset.pattern.permute.xlu0 0
  %398 = vperm.xlu0 %397, %v320
  %v399 = vpop.permute.xlu0 %398
  %v401 = vlaneseq
  %v402 = vshrl.u32 %v401, 7
  %v403 = vsub.s32 1, %v402
  %v404 = vrot.slane %v188, %v403
  %v405 = vmul.f32 %v324, %v404
  %v406 = vmul.f32 %v329, %v404
  %v407 = vmul.f32 %v334, %v404
  %v408 = vmul.f32 %v339, %v404
  %v409 = vmul.f32 %v344, %v404
  %v410 = vmul.f32 %v349, %v404
  %v411 = vmul.f32 %v354, %v404
  %v412 = vmul.f32 %v359, %v404
  %v413 = vmul.f32 %v364, %v404
  %v414 = vmul.f32 %v369, %v404
  %v415 = vmul.f32 %v374, %v404
  %v416 = vmul.f32 %v379, %v404
  %v417 = vmul.f32 %v384, %v404
  %v418 = vmul.f32 %v389, %v404
  %v419 = vmul.f32 %v394, %v404
  %v420 = vmul.f32 %v399, %v404
  %v421 = vadd.f32 %v289, %v405
  %v422 = vadd.f32 %v290, %v406
  %v423 = vadd.f32 %v291, %v407
  %v424 = vadd.f32 %v292, %v408
  %v425 = vadd.f32 %v293, %v409
  %v426 = vadd.f32 %v294, %v410
  %v427 = vadd.f32 %v295, %v411
  %v428 = vadd.f32 %v296, %v412
  %v429 = vadd.f32 %v297, %v413
  %v430 = vadd.f32 %v298, %v414
  %v431 = vadd.f32 %v299, %v415
  %v432 = vadd.f32 %v300, %v416
  %v433 = vadd.f32 %v301, %v417
  %v434 = vadd.f32 %v302, %v418
  %v435 = vadd.f32 %v303, %v419
  %v436 = vadd.f32 %v304, %v420
  %v437 = vld [vmem:[%s6] sm:$0x1]
  %v439 = vlaneseq
  %v440 = vshrl.u32 %v439, 7
  %v441 = vsub.s32 0, %v440
  %v442 = vrot.slane %v437, %v441
  %v444 = vadd.f32 %v421, %v442
  %v445 = vadd.f32 %v422, %v442
  %v446 = vadd.f32 %v423, %v442
  %v447 = vadd.f32 %v424, %v442
  %v448 = vadd.f32 %v425, %v442
  %v449 = vadd.f32 %v426, %v442
  %v450 = vadd.f32 %v427, %v442
  %v451 = vadd.f32 %v428, %v442
  %v452 = vadd.f32 %v429, %v442
  %v453 = vadd.f32 %v430, %v442
  %v454 = vadd.f32 %v431, %v442
  %v455 = vadd.f32 %v432, %v442
  %v456 = vadd.f32 %v433, %v442
  %v457 = vadd.f32 %v434, %v442
  %v458 = vadd.f32 %v435, %v442
  %v459 = vadd.f32 %v436, %v442
  %v460 = vadd.f32 %v126, %v444
  %v461 = vadd.f32 %v129, %v445
  %v462 = vadd.f32 %v134, %v446
  %v463 = vadd.f32 %v137, %v447
  %v464 = vadd.f32 %v142, %v448
  %v465 = vadd.f32 %v145, %v449
  %v466 = vadd.f32 %v150, %v450
  %v467 = vadd.f32 %v153, %v451
  %v468 = vadd.f32 %v158, %v452
  %v469 = vadd.f32 %v161, %v453
  %v470 = vadd.f32 %v166, %v454
  %v471 = vadd.f32 %v169, %v455
  %v472 = vadd.f32 %v174, %v456
  %v473 = vadd.f32 %v177, %v457
  %v474 = vadd.f32 %v182, %v458
  %v475 = vadd.f32 %v185, %v459
  %v476 = vpack.c.bf16 %v461, %v460
  %v477 = vpack.c.bf16 %v463, %v462
  %v478 = vpack.c.bf16 %v465, %v464
  %v479 = vpack.c.bf16 %v467, %v466
  %v480 = vpack.c.bf16 %v469, %v468
  %v481 = vpack.c.bf16 %v471, %v470
  %v482 = vpack.c.bf16 %v473, %v472
  %v483 = vpack.c.bf16 %v475, %v474
  %v492 = vunpack.c.l.b16 %v476
  %v493 = vunpack.c.h.b16 %v476
  %v494 = vunpack.c.l.b16 %v477
  %v495 = vunpack.c.h.b16 %v477
  %v496 = vunpack.c.l.b16 %v478
  %v497 = vunpack.c.h.b16 %v478
  %v498 = vunpack.c.l.b16 %v479
  %v499 = vunpack.c.h.b16 %v479
  %v500 = vunpack.c.l.b16 %v480
  %v501 = vunpack.c.h.b16 %v480
  %v502 = vunpack.c.l.b16 %v481
  %v503 = vunpack.c.h.b16 %v481
  %v504 = vunpack.c.l.b16 %v482
  %v505 = vunpack.c.h.b16 %v482
  %v506 = vunpack.c.l.b16 %v483
  %v507 = vunpack.c.h.b16 %v483
  %v508 = vpack.c.b16 %v492, %v492
  %v509 = vpack.c.b16 %v493, %v493
  %v510 = vpack.c.b16 %v494, %v494
  %v511 = vpack.c.b16 %v495, %v495
  %v512 = vpack.c.b16 %v496, %v496
  %v513 = vpack.c.b16 %v497, %v497
  %v514 = vpack.c.b16 %v498, %v498
  %v515 = vpack.c.b16 %v499, %v499
  %v516 = vpack.c.b16 %v500, %v500
  %v517 = vpack.c.b16 %v501, %v501
  %v518 = vpack.c.b16 %v502, %v502
  %v519 = vpack.c.b16 %v503, %v503
  %v520 = vpack.c.b16 %v504, %v504
  %v521 = vpack.c.b16 %v505, %v505
  %v522 = vpack.c.b16 %v506, %v506
  %v523 = vpack.c.b16 %v507, %v507
  %vm540 = vcmask 257024
  %541 = vst.msk [vmem:[%s7] sm:$0xf] %vm540, %v508
  %542 = vst.msk [vmem:[%s7 + $0x4] sm:$0xf] %vm540, %v509
  %543 = vst.msk [vmem:[%s7 + $0x8] sm:$0xf] %vm540, %v510
  %544 = vst.msk [vmem:[%s7 + $0xc] sm:$0xf] %vm540, %v511
  %545 = vst.msk [vmem:[%s7 + $0x10] sm:$0xf] %vm540, %v512
  %546 = vst.msk [vmem:[%s7 + $0x14] sm:$0xf] %vm540, %v513
  %547 = vst.msk [vmem:[%s7 + $0x18] sm:$0xf] %vm540, %v514
  %548 = vst.msk [vmem:[%s7 + $0x1c] sm:$0xf] %vm540, %v515
  %549 = vst.msk [vmem:[%s7 + $0x20] sm:$0xf] %vm540, %v516
  %550 = vst.msk [vmem:[%s7 + $0x24] sm:$0xf] %vm540, %v517
  %551 = vst.msk [vmem:[%s7 + $0x28] sm:$0xf] %vm540, %v518
  %552 = vst.msk [vmem:[%s7 + $0x2c] sm:$0xf] %vm540, %v519
  %553 = vst.msk [vmem:[%s7 + $0x30] sm:$0xf] %vm540, %v520
  %554 = vst.msk [vmem:[%s7 + $0x34] sm:$0xf] %vm540, %v521
  %555 = vst.msk [vmem:[%s7 + $0x38] sm:$0xf] %vm540, %v522
  %556 = vst.msk [vmem:[%s7 + $0x3c] sm:$0xf] %vm540, %v523
  // Predicated region
  $region30: #{tpu_custom_call.1} parent=0 // pred_check
    _
  $region31: #{tpu_custom_call.1} parent=0 // pred_check_branch
    %558 = sbr.rel (0) target = $region33
  $region32: #{tpu_custom_call.1} parent=0 // pred_region
    _
  $region33: #{tpu_custom_call.1} parent=0 // pred_fallthru
    _
  // Predicated region
  $region34: #{tpu_custom_call.1} parent=0 // pred_check
    _
  $region35: #{tpu_custom_call.1} parent=0 // pred_check_branch
    %560 = sbr.rel (0) target = $region37
  $region36: #{tpu_custom_call.1} parent=0 // pred_region
    _
  $region37: #{tpu_custom_call.1} parent=0 // pred_fallthru
    _

</llo_original>
